<compile_context>
chip_gen: v5e
topology: v5e:2x2
jax: 0.10.0
libtpu: 0.0.40
codegen_flags: <defaults>
</compile_context>

<pallas_src>
import math

import jax
import jax.numpy as jnp
from jax.experimental import pallas as pl
from jax.experimental.pallas import tpu as pltpu

BN_EPS = 1e-5
LANE = 128     # lane width (last dim)
SUBLANE = 8    # f32 sublane (second-to-last dim)
USE_BF16_MATMUL = False   # v6e/v7x MXU throughput knob; breaks 1e-4 f32 check


# ---------------------------------------------------------------------------
# Fused Pallas kernel: the whole MLP in one call, weights resident in VMEM.
# ---------------------------------------------------------------------------
def _make_fused_dnn_kernel(hidden_layer, true_batch, padded_batch,
                           use_bf16=False):
    inv_b = 1.0 / float(true_batch)
    need_mask = (true_batch != padded_batch)   # static branch, no runtime select

    def _mm(a, w):
        if use_bf16:
            return jnp.dot(a.astype(jnp.bfloat16), w.astype(jnp.bfloat16),
                           preferred_element_type=jnp.float32)
        return jnp.dot(a, w, preferred_element_type=jnp.float32)

    def kernel(*refs):
        # refs = (x, w0, b0, [gamma_i, beta_i, w_i, b_i] * hidden_layer, out)
        x_ref = refs[0]
        o_ref = refs[-1]
        p = refs[1:-1]

        x = x_ref[...]
        if need_mask:
            # Row mask so padded batch rows never enter the BN statistics.
            row_ids = jax.lax.broadcasted_iota(jnp.int32, (padded_batch, 1), 0)
            row_mask = row_ids < true_batch

        # First Linear: h = x @ W0 + b0   (f32 accumulate on the MXU).
        h = _mm(x, p[0][...]) + p[1][...]

        idx = 2
        for _ in range(hidden_layer):
            gamma = p[idx][...]
            beta = p[idx + 1][...]
            w = p[idx + 2][...]
            b = p[idx + 3][...]
            idx += 4

            # ReLU
            r = jnp.maximum(h, 0.0)

            # BatchNorm1d (training mode): two-pass masked mean / centered var.
            rm = jnp.where(row_mask, r, 0.0) if need_mask else r
            mean = jnp.sum(rm, axis=0, keepdims=True) * inv_b
            c = r - mean
            cm = jnp.where(row_mask, c, 0.0) if need_mask else c
            var = jnp.sum(cm * cm, axis=0, keepdims=True) * inv_b
            inv_std = jax.lax.rsqrt(var + BN_EPS)        # EUP
            scale = gamma * inv_std                      # (1, H) vector math
            shift = beta - mean * scale                  # (1, H) vector math
            hn = r * scale + shift                       # 2 VPU ops on (B, H)

            # Next Linear (last one maps hidden -> num_classes).
            h = _mm(hn, w) + b

        o_ref[...] = h

    return kernel


# ---------------------------------------------------------------------------
# Padding helpers (zero padding keeps padded lanes exactly zero end-to-end)
# ---------------------------------------------------------------------------
def _round_up(n, m):
    return ((n + m - 1) // m) * m


def _pad2(a, rows, cols):
    return jnp.pad(a, ((0, rows - a.shape[0]), (0, cols - a.shape[1])))


def _pad_row(v, cols):
    return jnp.pad(v, (0, cols - v.shape[0])).reshape(1, cols)


# ---------------------------------------------------------------------------
# Parameter construction (deterministic, PyTorch-style init, W stored [in,out])
# ---------------------------------------------------------------------------
def init_dnn_params(key, input_size, hidden_layer, hidden_size, num_classes):
    params = []

    def linear_init(k, in_f, out_f):
        kw, kb = jax.random.split(k)
        bound = 1.0 / math.sqrt(in_f)
        w = jax.random.uniform(kw, (in_f, out_f), jnp.float32, -bound, bound)
        b = jax.random.uniform(kb, (out_f,), jnp.float32, -bound, bound)
        return {"type": "linear", "w": w, "b": b}

    keys = jax.random.split(key, hidden_layer + 1)
    params.append(linear_init(keys[0], input_size, hidden_size))
    for i in range(hidden_layer):
        params.append({
            "type": "relu_bn",
            "gamma": jnp.ones((hidden_size,), jnp.float32),
            "beta": jnp.zeros((hidden_size,), jnp.float32),
        })
        out_f = num_classes if i == hidden_layer - 1 else hidden_size
        params.append(linear_init(keys[i + 1], hidden_size, out_f))
    return params


# ---------------------------------------------------------------------------
# Build: pad parameters ONCE, return a jitted forward taking only x.
# ---------------------------------------------------------------------------
def build_dnn_forward(params):
    linears = [p for p in params if p["type"] == "linear"]
    bns = [p for p in params if p["type"] == "relu_bn"]
    hidden_layer = len(bns)
    in_f = linears[0]["w"].shape[0]
    hidden = linears[0]["w"].shape[1]
    num_classes = linears[-1]["w"].shape[1]

    inp = _round_up(in_f, LANE)
    hp = _round_up(hidden, LANE)
    ncp = _round_up(num_classes, LANE)

    # --- Pad all parameters ONCE (hoisted out of the per-call path). ---------
    packed = [_pad2(linears[0]["w"], inp, hp), _pad_row(linears[0]["b"], hp)]
    for i in range(hidden_layer):
        outp = ncp if i == hidden_layer - 1 else hp
        packed.append(_pad_row(bns[i]["gamma"], hp))
        packed.append(_pad_row(bns[i]["beta"], hp))
        packed.append(_pad2(linears[i + 1]["w"], hp, outp))
        packed.append(_pad_row(linears[i + 1]["b"], outp))
    packed = tuple(packed)
    param_bytes = sum(int(a.size) * 4 for a in packed)

    @jax.jit
    def _fwd(packed_args, x):
        batch = x.shape[0]
        bp = _round_up(batch, SUBLANE)
        xpad = jnp.pad(x, ((0, bp - batch), (0, inp - in_f)))

        # VMEM budget: padded params + x + out + a few live (bp, hp)
        # activation temporaries per layer, with 2x margin.  Capped below the
        # v7x physical 64 MiB so the limit is portable across generations.
        act_bytes = (bp * inp + bp * ncp + 6 * bp * hp) * 4
        vmem_limit = int(min(max(2 * (param_bytes + act_bytes), 8 << 20),
                             56 << 20))

        n_inputs = 1 + len(packed_args)
        kernel = _make_fused_dnn_kernel(hidden_layer, batch, bp,
                                        use_bf16=USE_BF16_MATMUL)

        out_padded = pl.pallas_call(
            kernel,
            out_shape=jax.ShapeDtypeStruct((bp, ncp), jnp.float32),
            in_specs=[pl.BlockSpec(memory_space=pltpu.MemorySpace.VMEM)] * n_inputs,
            out_specs=pl.BlockSpec(memory_space=pltpu.MemorySpace.VMEM),
            compiler_params=pltpu.CompilerParams(vmem_limit_bytes=vmem_limit),
        )(xpad, *packed_args)

        return out_padded[:batch, :num_classes]

    def forward(x):
        return _fwd(packed, x)

    return forward


# ---------------------------------------------------------------------------
# Pure-JAX reference (PyTorch training-mode semantics)
# ---------------------------------------------------------------------------
def dnn_forward_ref(params, x):
    for layer in params:
        if layer["type"] == "linear":
            x = x @ layer["w"] + layer["b"]
        else:
            r = jnp.maximum(x, 0.0)
            mean = jnp.mean(r, axis=0, keepdims=True)
            var = jnp.mean((r - mean) ** 2, axis=0, keepdims=True)
            x = layer["gamma"] * (r - mean) / jnp.sqrt(var + BN_EPS) + layer["beta"]
    return x


if __name__ == "__main__":
    input_size = 32
    hidden_layer = 2
    hidden_size = 32
    num_classes = 8

    key = jax.random.PRNGKey(0)
    kx1, kx2, kp = jax.random.split(key, 3)

    params = init_dnn_params(kp, input_size, hidden_layer, hidden_size, num_classes)
    forward = build_dnn_forward(params)   # params padded once here

    # Case 1: batch not a multiple of 8 -> exercises the masked-BN path.
    x1 = jax.random.normal(kx1, (6, input_size), dtype=jnp.float32)
    out1 = jax.block_until_ready(forward(x1))
    ref1 = dnn_forward_ref(params, x1)
    assert out1.shape == (6, num_classes)
    assert jnp.allclose(out1, ref1, atol=1e-4, rtol=1e-4), \
        float(jnp.max(jnp.abs(out1 - ref1)))

    # Case 2: sublane-aligned batch -> exercises the static mask-free path.
    x2 = jax.random.normal(kx2, (8, input_size), dtype=jnp.float32)
    out2 = jax.block_until_ready(forward(x2))
    ref2 = dnn_forward_ref(params, x2)
    assert out2.shape == (8, num_classes)
    assert jnp.allclose(out2, ref2, atol=1e-4, rtol=1e-4), \
        float(jnp.max(jnp.abs(out2 - ref2)))

    print("KERNEL_OK")
</pallas_src>

<mosaic_0001>
module attributes {stable_mosaic.version = 11 : i64} {
  func.func @kernel(%arg0: memref<8x128xf32, #tpu.memory_space<vmem>>, %arg1: memref<128x128xf32, #tpu.memory_space<vmem>>, %arg2: memref<1x128xf32, #tpu.memory_space<vmem>>, %arg3: memref<1x128xf32, #tpu.memory_space<vmem>>, %arg4: memref<1x128xf32, #tpu.memory_space<vmem>>, %arg5: memref<128x128xf32, #tpu.memory_space<vmem>>, %arg6: memref<1x128xf32, #tpu.memory_space<vmem>>, %arg7: memref<1x128xf32, #tpu.memory_space<vmem>>, %arg8: memref<1x128xf32, #tpu.memory_space<vmem>>, %arg9: memref<128x128xf32, #tpu.memory_space<vmem>>, %arg10: memref<1x128xf32, #tpu.memory_space<vmem>>, %arg11: memref<8x128xf32, #tpu.memory_space<vmem>>) attributes {dimension_semantics = [], scalar_prefetch = 0 : i64, scratch_operands = 0 : i64, tpu.core_type = #tpu.core_type<tc>} {
    %c0 = arith.constant 0 : index
    %c0_0 = arith.constant 0 : index
    %0 = vector.load %arg0[%c0, %c0_0] : memref<8x128xf32, #tpu.memory_space<vmem>>, vector<8x128xf32>
    %1 = tpu.iota {dimensions = array<i32: 0>} : vector<8x1xi32>
    %c6_i32 = arith.constant 6 : i32
    %2 = vector.broadcast %c6_i32 : i32 to vector<8x1xi32>
    %3 = arith.cmpi slt, %1, %2 : vector<8x1xi32>
    %c0_1 = arith.constant 0 : index
    %c0_2 = arith.constant 0 : index
    %4 = vector.load %arg1[%c0_1, %c0_2] : memref<128x128xf32, #tpu.memory_space<vmem>>, vector<128x128xf32>
    %cst = arith.constant dense<0.000000e+00> : vector<8x128xf32>
    %5 = tpu.matmul %0, %4, %cst {dimension_numbers = #tpu.dot_dimension_numbers<[1], [0], [0], [1], [0, 0, 1, 1], [], []>} : vector<8x128xf32>, vector<128x128xf32>, vector<8x128xf32> -> vector<8x128xf32>
    %c0_3 = arith.constant 0 : index
    %c0_4 = arith.constant 0 : index
    %6 = vector.load %arg2[%c0_3, %c0_4] : memref<1x128xf32, #tpu.memory_space<vmem>>, vector<1x128xf32>
    %7 = vector.broadcast %6 : vector<1x128xf32> to vector<8x128xf32>
    %8 = arith.addf %5, %7 : vector<8x128xf32>
    %c0_5 = arith.constant 0 : index
    %c0_6 = arith.constant 0 : index
    %9 = vector.load %arg3[%c0_5, %c0_6] : memref<1x128xf32, #tpu.memory_space<vmem>>, vector<1x128xf32>
    %c0_7 = arith.constant 0 : index
    %c0_8 = arith.constant 0 : index
    %10 = vector.load %arg4[%c0_7, %c0_8] : memref<1x128xf32, #tpu.memory_space<vmem>>, vector<1x128xf32>
    %c0_9 = arith.constant 0 : index
    %c0_10 = arith.constant 0 : index
    %11 = vector.load %arg5[%c0_9, %c0_10] : memref<128x128xf32, #tpu.memory_space<vmem>>, vector<128x128xf32>
    %c0_11 = arith.constant 0 : index
    %c0_12 = arith.constant 0 : index
    %12 = vector.load %arg6[%c0_11, %c0_12] : memref<1x128xf32, #tpu.memory_space<vmem>>, vector<1x128xf32>
    %cst_13 = arith.constant 0.000000e+00 : f32
    %13 = vector.broadcast %cst_13 : f32 to vector<8x128xf32>
    %14 = arith.maximumf %8, %13 : vector<8x128xf32>
    %cst_14 = arith.constant 0.000000e+00 : f32
    %15 = vector.shape_cast %3 : vector<8x1xi1> to vector<8x1xi1>
    %16 = vector.broadcast %15 : vector<8x1xi1> to vector<8x128xi1>
    %17 = vector.broadcast %cst_14 : f32 to vector<8x128xf32>
    %18 = arith.select %16, %14, %17 : vector<8x128xi1>, vector<8x128xf32>
    %cst_15 = arith.constant dense<0.000000e+00> : vector<128xf32>
    %19 = vector.multi_reduction <add>, %18, %cst_15 [0] : vector<8x128xf32> to vector<128xf32>
    %20 = vector.shape_cast %19 : vector<128xf32> to vector<1x128xf32>
    %cst_16 = arith.constant 0.166666672 : f32
    %21 = vector.broadcast %cst_16 : f32 to vector<1x128xf32>
    %22 = arith.mulf %20, %21 : vector<1x128xf32>
    %23 = vector.broadcast %22 : vector<1x128xf32> to vector<8x128xf32>
    %24 = arith.subf %14, %23 : vector<8x128xf32>
    %cst_17 = arith.constant 0.000000e+00 : f32
    %25 = vector.shape_cast %3 : vector<8x1xi1> to vector<8x1xi1>
    %26 = vector.broadcast %25 : vector<8x1xi1> to vector<8x128xi1>
    %27 = vector.broadcast %cst_17 : f32 to vector<8x128xf32>
    %28 = arith.select %26, %24, %27 : vector<8x128xi1>, vector<8x128xf32>
    %29 = arith.mulf %28, %28 : vector<8x128xf32>
    %cst_18 = arith.constant dense<0.000000e+00> : vector<128xf32>
    %30 = vector.multi_reduction <add>, %29, %cst_18 [0] : vector<8x128xf32> to vector<128xf32>
    %31 = vector.shape_cast %30 : vector<128xf32> to vector<1x128xf32>
    %cst_19 = arith.constant 0.166666672 : f32
    %32 = vector.broadcast %cst_19 : f32 to vector<1x128xf32>
    %33 = arith.mulf %31, %32 : vector<1x128xf32>
    %cst_20 = arith.constant 9.99999974E-6 : f32
    %34 = vector.broadcast %cst_20 : f32 to vector<1x128xf32>
    %35 = arith.addf %33, %34 : vector<1x128xf32>
    %36 = math.rsqrt %35 : vector<1x128xf32>
    %37 = arith.mulf %9, %36 : vector<1x128xf32>
    %38 = arith.mulf %22, %37 : vector<1x128xf32>
    %39 = arith.subf %10, %38 : vector<1x128xf32>
    %40 = vector.broadcast %37 : vector<1x128xf32> to vector<8x128xf32>
    %41 = arith.mulf %14, %40 : vector<8x128xf32>
    %42 = vector.broadcast %39 : vector<1x128xf32> to vector<8x128xf32>
    %43 = arith.addf %41, %42 : vector<8x128xf32>
    %cst_21 = arith.constant dense<0.000000e+00> : vector<8x128xf32>
    %44 = tpu.matmul %43, %11, %cst_21 {dimension_numbers = #tpu.dot_dimension_numbers<[1], [0], [0], [1], [0, 0, 1, 1], [], []>} : vector<8x128xf32>, vector<128x128xf32>, vector<8x128xf32> -> vector<8x128xf32>
    %45 = vector.broadcast %12 : vector<1x128xf32> to vector<8x128xf32>
    %46 = arith.addf %44, %45 : vector<8x128xf32>
    %c0_22 = arith.constant 0 : index
    %c0_23 = arith.constant 0 : index
    %47 = vector.load %arg7[%c0_22, %c0_23] : memref<1x128xf32, #tpu.memory_space<vmem>>, vector<1x128xf32>
    %c0_24 = arith.constant 0 : index
    %c0_25 = arith.constant 0 : index
    %48 = vector.load %arg8[%c0_24, %c0_25] : memref<1x128xf32, #tpu.memory_space<vmem>>, vector<1x128xf32>
    %c0_26 = arith.constant 0 : index
    %c0_27 = arith.constant 0 : index
    %49 = vector.load %arg9[%c0_26, %c0_27] : memref<128x128xf32, #tpu.memory_space<vmem>>, vector<128x128xf32>
    %c0_28 = arith.constant 0 : index
    %c0_29 = arith.constant 0 : index
    %50 = vector.load %arg10[%c0_28, %c0_29] : memref<1x128xf32, #tpu.memory_space<vmem>>, vector<1x128xf32>
    %cst_30 = arith.constant 0.000000e+00 : f32
    %51 = vector.broadcast %cst_30 : f32 to vector<8x128xf32>
    %52 = arith.maximumf %46, %51 : vector<8x128xf32>
    %cst_31 = arith.constant 0.000000e+00 : f32
    %53 = vector.shape_cast %3 : vector<8x1xi1> to vector<8x1xi1>
    %54 = vector.broadcast %53 : vector<8x1xi1> to vector<8x128xi1>
    %55 = vector.broadcast %cst_31 : f32 to vector<8x128xf32>
    %56 = arith.select %54, %52, %55 : vector<8x128xi1>, vector<8x128xf32>
    %cst_32 = arith.constant dense<0.000000e+00> : vector<128xf32>
    %57 = vector.multi_reduction <add>, %56, %cst_32 [0] : vector<8x128xf32> to vector<128xf32>
    %58 = vector.shape_cast %57 : vector<128xf32> to vector<1x128xf32>
    %cst_33 = arith.constant 0.166666672 : f32
    %59 = vector.broadcast %cst_33 : f32 to vector<1x128xf32>
    %60 = arith.mulf %58, %59 : vector<1x128xf32>
    %61 = vector.broadcast %60 : vector<1x128xf32> to vector<8x128xf32>
    %62 = arith.subf %52, %61 : vector<8x128xf32>
    %cst_34 = arith.constant 0.000000e+00 : f32
    %63 = vector.shape_cast %3 : vector<8x1xi1> to vector<8x1xi1>
    %64 = vector.broadcast %63 : vector<8x1xi1> to vector<8x128xi1>
    %65 = vector.broadcast %cst_34 : f32 to vector<8x128xf32>
    %66 = arith.select %64, %62, %65 : vector<8x128xi1>, vector<8x128xf32>
    %67 = arith.mulf %66, %66 : vector<8x128xf32>
    %cst_35 = arith.constant dense<0.000000e+00> : vector<128xf32>
    %68 = vector.multi_reduction <add>, %67, %cst_35 [0] : vector<8x128xf32> to vector<128xf32>
    %69 = vector.shape_cast %68 : vector<128xf32> to vector<1x128xf32>
    %cst_36 = arith.constant 0.166666672 : f32
    %70 = vector.broadcast %cst_36 : f32 to vector<1x128xf32>
    %71 = arith.mulf %69, %70 : vector<1x128xf32>
    %cst_37 = arith.constant 9.99999974E-6 : f32
    %72 = vector.broadcast %cst_37 : f32 to vector<1x128xf32>
    %73 = arith.addf %71, %72 : vector<1x128xf32>
    %74 = math.rsqrt %73 : vector<1x128xf32>
    %75 = arith.mulf %47, %74 : vector<1x128xf32>
    %76 = arith.mulf %60, %75 : vector<1x128xf32>
    %77 = arith.subf %48, %76 : vector<1x128xf32>
    %78 = vector.broadcast %75 : vector<1x128xf32> to vector<8x128xf32>
    %79 = arith.mulf %52, %78 : vector<8x128xf32>
    %80 = vector.broadcast %77 : vector<1x128xf32> to vector<8x128xf32>
    %81 = arith.addf %79, %80 : vector<8x128xf32>
    %cst_38 = arith.constant dense<0.000000e+00> : vector<8x128xf32>
    %82 = tpu.matmul %81, %49, %cst_38 {dimension_numbers = #tpu.dot_dimension_numbers<[1], [0], [0], [1], [0, 0, 1, 1], [], []>} : vector<8x128xf32>, vector<128x128xf32>, vector<8x128xf32> -> vector<8x128xf32>
    %83 = vector.broadcast %50 : vector<1x128xf32> to vector<8x128xf32>
    %84 = arith.addf %82, %83 : vector<8x128xf32>
    %c0_39 = arith.constant 0 : index
    %c0_40 = arith.constant 0 : index
    %85 = vector.load %arg11[%c0_39, %c0_40] : memref<8x128xf32, #tpu.memory_space<vmem>>, vector<8x128xf32>
    tpu.vector_store %arg11[%c0_39, %c0_40], %84 {strides = array<i32>} : memref<8x128xf32, #tpu.memory_space<vmem>>, vector<8x128xf32>,
    return
  }
}

</mosaic_0001>

<llo_original>
// kernel: _fwd.1
$region0: #{_fwd.1}
  #allocation0 [shape = 'u32[]', space=smem, size = 0x4, offset = 0x4, fixed_abs, tag = 'smem constant byte address 0x4 - core index']
  #allocation1 [shape = 'u32[72,128]{1,0:T(1,128)}', space=vmem, size = 0x9000, scoped, tag = 'internal scratch']
  %s0 = inlined_call_operand.vmem [shape: f32[8,128], index: 0, kind: input, shape index: {}]
  %s1 = inlined_call_operand.hbm [shape: f32[128,128], index: 1, kind: input, shape index: {}]
  %s2 = inlined_call_operand.vmem [shape: f32[1,128], index: 2, kind: input, shape index: {}]
  %s3 = inlined_call_operand.vmem [shape: f32[1,128], index: 3, kind: input, shape index: {}]
  %s4 = inlined_call_operand.vmem [shape: f32[1,128], index: 4, kind: input, shape index: {}]
  %s5 = inlined_call_operand.hbm [shape: f32[128,128], index: 5, kind: input, shape index: {}]
  %s6 = inlined_call_operand.vmem [shape: f32[1,128], index: 6, kind: input, shape index: {}]
  %s7 = inlined_call_operand.vmem [shape: f32[1,128], index: 7, kind: input, shape index: {}]
  %s8 = inlined_call_operand.vmem [shape: f32[1,128], index: 8, kind: input, shape index: {}]
  %s9 = inlined_call_operand.hbm [shape: f32[128,128], index: 9, kind: input, shape index: {}]
  %s10 = inlined_call_operand.vmem [shape: f32[1,128], index: 10, kind: input, shape index: {}]
  %s11 = inlined_call_operand.hbm [shape: f32[8,128], index: 11, kind: output, shape index: {}]
  %s12 = sld [smem:[#allocation0]]
  $region66: #{_fwd.1} parent=0
    _
  %s14 = ssub.s32 1, %s12
  %s15 = scalar_select 0, %s14, %s12
  $region1: #{_fwd.1} parent=0
    #allocation2 [shape = 'u8[65536]{0}', space=vmem, size = 0x10000, scoped, tag = 'input window, operand 1, single buffered']
    #allocation3 [shape = 's32[1]{0}', space=sflag, size = 0x4, scoped, tag = 'scoped memory for _fwd.1']
    #allocation4 [shape = 's32[1]{0}', space=sflag, size = 0x4, scoped, tag = 'scoped memory for _fwd.1']
    #allocation5 [shape = 'u8[65536]{0}', space=vmem, size = 0x10000, scoped, tag = 'input window, operand 5, single buffered']
    #allocation6 [shape = 's32[1]{0}', space=sflag, size = 0x4, scoped, tag = 'scoped memory for _fwd.1']
    #allocation7 [shape = 'u8[65536]{0}', space=vmem, size = 0x10000, scoped, tag = 'input window, operand 9, single buffered']
    #allocation8 [shape = 'u8[4096]{0}', space=vmem, size = 0x1000, scoped, tag = 'output window, operand 0, single buffered']
    %16 = vsyncpa [#allocation3], 0
    %17 = vsyncpa [#allocation6], 0
    %18 = vsyncpa [#allocation4], 0
    // Predicated region
    $region2: #{_fwd.1} parent=1 // pred_check
      _
    $region3: #{_fwd.1} parent=1 // pred_check_branch
      %20 = sbr.rel (0) target = $region5
    $region4: #{_fwd.1} parent=1 // pred_region
      _
    $region5: #{_fwd.1} parent=1 // pred_fallthru
      _
    // Predicated region
    $region6: #{_fwd.1} parent=1 // pred_check
      _
    $region7: #{_fwd.1} parent=1 // pred_check_branch
      %22 = sbr.rel (0) target = $region9
    $region8: #{_fwd.1} parent=1 // pred_region
      %24 = vsyncadd [#allocation3], 0
      %s25 = sshll.u32 %s1, 4
      %s26 = int_to_ptr.hbm [resolvable:$true] %s25
      %s27 = sshll.u32 [#allocation2], 4
      %s28 = int_to_ptr.vmem [resolvable:$true] %s27
      %33 = dma.hbm_to_vmem [thread:$0]  %s26, 2048, %s28, [#allocation3], 128, 128, 8
    $region9: #{_fwd.1} parent=1 // pred_fallthru
      _
    // Predicated region
    $region10: #{_fwd.1} parent=1 // pred_check
      _
    $region11: #{_fwd.1} parent=1 // pred_check_branch
      %35 = sbr.rel (0) target = $region13
    $region12: #{_fwd.1} parent=1 // pred_region
      _
    $region13: #{_fwd.1} parent=1 // pred_fallthru
      _
    // Predicated region
    $region14: #{_fwd.1} parent=1 // pred_check
      _
    $region15: #{_fwd.1} parent=1 // pred_check_branch
      %37 = sbr.rel (0) target = $region17
    $region16: #{_fwd.1} parent=1 // pred_region
      _
    $region17: #{_fwd.1} parent=1 // pred_fallthru
      _
    // Predicated region
    $region18: #{_fwd.1} parent=1 // pred_check
      _
    $region19: #{_fwd.1} parent=1 // pred_check_branch
      %39 = sbr.rel (0) target = $region21
    $region20: #{_fwd.1} parent=1 // pred_region
      _
    $region21: #{_fwd.1} parent=1 // pred_fallthru
      _
    // Predicated region
    $region22: #{_fwd.1} parent=1 // pred_check
      _
    $region23: #{_fwd.1} parent=1 // pred_check_branch
      %41 = sbr.rel (0) target = $region25
    $region24: #{_fwd.1} parent=1 // pred_region
      %43 = vsyncadd [#allocation6], 0
      %s44 = sshll.u32 %s5, 4
      %s45 = int_to_ptr.hbm [resolvable:$true] %s44
      %s46 = sshll.u32 [#allocation5], 4
      %s47 = int_to_ptr.vmem [resolvable:$true] %s46
      %52 = dma.hbm_to_vmem [thread:$0]  %s45, 2048, %s47, [#allocation6], 128, 128, 8
    $region25: #{_fwd.1} parent=1 // pred_fallthru
      _
    // Predicated region
    $region26: #{_fwd.1} parent=1 // pred_check
      _
    $region27: #{_fwd.1} parent=1 // pred_check_branch
      %54 = sbr.rel (0) target = $region29
    $region28: #{_fwd.1} parent=1 // pred_region
      _
    $region29: #{_fwd.1} parent=1 // pred_fallthru
      _
    // Predicated region
    $region30: #{_fwd.1} parent=1 // pred_check
      _
    $region31: #{_fwd.1} parent=1 // pred_check_branch
      %56 = sbr.rel (0) target = $region33
    $region32: #{_fwd.1} parent=1 // pred_region
      _
    $region33: #{_fwd.1} parent=1 // pred_fallthru
      _
    // Predicated region
    $region34: #{_fwd.1} parent=1 // pred_check
      _
    $region35: #{_fwd.1} parent=1 // pred_check_branch
      %58 = sbr.rel (0) target = $region37
    $region36: #{_fwd.1} parent=1 // pred_region
      _
    $region37: #{_fwd.1} parent=1 // pred_fallthru
      _
    // Predicated region
    $region38: #{_fwd.1} parent=1 // pred_check
      _
    $region39: #{_fwd.1} parent=1 // pred_check_branch
      %60 = sbr.rel (0) target = $region41
    $region40: #{_fwd.1} parent=1 // pred_region
      %62 = vsyncadd [#allocation6], 0
      %s63 = sshll.u32 %s9, 4
      %s64 = int_to_ptr.hbm [resolvable:$true] %s63
      %s65 = sshll.u32 [#allocation7], 4
      %s66 = int_to_ptr.vmem [resolvable:$true] %s65
      %71 = dma.hbm_to_vmem [thread:$0]  %s64, 2048, %s66, [#allocation6], 128, 128, 8
    $region41: #{_fwd.1} parent=1 // pred_fallthru
      _
    // Predicated region
    $region42: #{_fwd.1} parent=1 // pred_check
      _
    $region43: #{_fwd.1} parent=1 // pred_check_branch
      %73 = sbr.rel (0) target = $region45
    $region44: #{_fwd.1} parent=1 // pred_region
      _
    $region45: #{_fwd.1} parent=1 // pred_fallthru
      _
    // Predicated region
    $region46: #{_fwd.1} parent=1 // pred_check
      _
    $region47: #{_fwd.1} parent=1 // pred_check_branch
      %75 = sbr.rel (0) target = $region49
    $region48: #{_fwd.1} parent=1 // pred_region
      %77 = dma.done [#allocation3], 2048
    $region49: #{_fwd.1} parent=1 // pred_fallthru
      _
    // Predicated region
    $region50: #{_fwd.1} parent=1 // pred_check
      _
    $region51: #{_fwd.1} parent=1 // pred_check_branch
      %79 = sbr.rel (0) target = $region53
    $region52: #{_fwd.1} parent=1 // pred_region
      %81 = dma.done [#allocation6], 2048
    $region53: #{_fwd.1} parent=1 // pred_fallthru
      _
    // Predicated region
    $region54: #{_fwd.1} parent=1 // pred_check
      _
    $region55: #{_fwd.1} parent=1 // pred_check_branch
      %83 = sbr.rel (0) target = $region57
    $region56: #{_fwd.1} parent=1 // pred_region
      %85 = dma.done [#allocation6], 2048
    $region57: #{_fwd.1} parent=1 // pred_fallthru
      _
    %v86 = vld [vmem:[%s0] sm:$0xff]
    %v87 = vlaneseq
    %v88 = vshrl.u32 %v87, 7
    %vm89 = vcmp.lt.s32.totalorder %v88, 6
    %v90 = vld [vmem:[#allocation2] sm:$0xff]
    %v91 = vld [vmem:[#allocation2 + $0x8] sm:$0xff]
    %v92 = vld [vmem:[#allocation2 + $0x10] sm:$0xff]
    %v93 = vld [vmem:[#allocation2 + $0x18] sm:$0xff]
    %v94 = vld [vmem:[#allocation2 + $0x20] sm:$0xff]
    %v95 = vld [vmem:[#allocation2 + $0x28] sm:$0xff]
    %v96 = vld [vmem:[#allocation2 + $0x30] sm:$0xff]
    %v97 = vld [vmem:[#allocation2 + $0x38] sm:$0xff]
    %v98 = vld [vmem:[#allocation2 + $0x40] sm:$0xff]
    %v99 = vld [vmem:[#allocation2 + $0x48] sm:$0xff]
    %v100 = vld [vmem:[#allocation2 + $0x50] sm:$0xff]
    %v101 = vld [vmem:[#allocation2 + $0x58] sm:$0xff]
    %v102 = vld [vmem:[#allocation2 + $0x60] sm:$0xff]
    %v103 = vld [vmem:[#allocation2 + $0x68] sm:$0xff]
    %v104 = vld [vmem:[#allocation2 + $0x70] sm:$0xff]
    %v105 = vld [vmem:[#allocation2 + $0x78] sm:$0xff]
    %v106 = vld [vmem:[%s2] sm:$0x1]
    %v108 = vperm.slane %v106, 0
    %110 = vmatpush.msra.mxu0 %v105
    %111 = vmatpush.msra.mxu0 %v104
    %112 = vmatpush.msra.mxu0 %v103
    %113 = vmatpush.msra.mxu0 %v102
    %114 = vmatpush.msra.mxu0 %v101
    %115 = vmatpush.msra.mxu0 %v100
    %116 = vmatpush.msra.mxu0 %v99
    %117 = vmatpush.msra.mxu0 %v98
    %118 = vmatpush.msra.mxu0 %v97
    %119 = vmatpush.msra.mxu0 %v96
    %120 = vmatpush.msra.mxu0 %v95
    %121 = vmatpush.msra.mxu0 %v94
    %122 = vmatpush.msra.mxu0 %v93
    %123 = vmatpush.msra.mxu0 %v92
    %124 = vmatpush.msra.mxu0 %v91
    %125 = vmatpush.msra.mxu0 %v90
    %126 = vmatmul.f32.gmra.mxu0 %v86
    %v127 = vpop.f32.mrf.mxu0
    %v128 = vadd.f32 %v108, %v127
    %129 = vdwg.mxu0
    %v130 = vld [vmem:[%s3] sm:$0x1]
    %v131 = vld [vmem:[%s4] sm:$0x1]
    %v132 = vld [vmem:[#allocation5] sm:$0xff]
    %v133 = vld [vmem:[#allocation5 + $0x8] sm:$0xff]
    %v134 = vld [vmem:[#allocation5 + $0x10] sm:$0xff]
    %v135 = vld [vmem:[#allocation5 + $0x18] sm:$0xff]
    %v136 = vld [vmem:[#allocation5 + $0x20] sm:$0xff]
    %v137 = vld [vmem:[#allocation5 + $0x28] sm:$0xff]
    %v138 = vld [vmem:[#allocation5 + $0x30] sm:$0xff]
    %v139 = vld [vmem:[#allocation5 + $0x38] sm:$0xff]
    %v140 = vld [vmem:[#allocation5 + $0x40] sm:$0xff]
    %v141 = vld [vmem:[#allocation5 + $0x48] sm:$0xff]
    %v142 = vld [vmem:[#allocation5 + $0x50] sm:$0xff]
    %v143 = vld [vmem:[#allocation5 + $0x58] sm:$0xff]
    %v144 = vld [vmem:[#allocation5 + $0x60] sm:$0xff]
    %v145 = vld [vmem:[#allocation5 + $0x68] sm:$0xff]
    %v146 = vld [vmem:[#allocation5 + $0x70] sm:$0xff]
    %v147 = vld [vmem:[#allocation5 + $0x78] sm:$0xff]
    %v148 = vld [vmem:[%s6] sm:$0x1]
    %v149 = vmax.f32 %v128, 0.0
    %v150 = vsel %vm89, 1, 0
    %vm151 = vcmp.eq.s32.totalorder %v150, 1
    %v152 = vsel %vm151, %v149, 0.0
    %v153 = vrot.slane %v152, 4
    %v154 = vadd.f32 %v152, %v153
    %v155 = vrot.slane %v154, 2
    %v156 = vadd.f32 %v154, %v155
    %v157 = vrot.slane %v156, 1
    %v158 = vadd.f32 %v156, %v157
    %v159 = vmul.f32 %v158, 0.16666667
    %v160 = vsub.f32 %v149, %v159
    %v161 = vsel %vm151, %v160, 0.0
    %v162 = vmul.f32 %v161, %v161
    %v163 = vrot.slane %v162, 4
    %v164 = vadd.f32 %v162, %v163
    %v165 = vrot.slane %v164, 2
    %v166 = vadd.f32 %v164, %v165
    %v167 = vrot.slane %v166, 1
    %v168 = vadd.f32 %v166, %v167
    %v169 = vmul.f32 %v168, 0.16666667
    %v170 = vadd.f32 %v169, 1e-05
    %v171 = vrsqrt.pop %v170
    %v172 = vmul.f32 %v171, %v170
    %v173 = vmul.f32 %v172, %v171
    %v174 = vmul.f32 0.5, %v173
    %v175 = vsub.f32 1.5, %v174
    %v176 = vmul.f32 %v171, %v175
    %vm177 = vweird.f32 %v170
    %vm178 = vweird.f32 %v171
    %vm179 = vmor %vm177, %vm178
    %v180 = vsel %vm179, %v171, %v176
    %v181 = vmul.f32 %v130, %v180
    %v182 = vmul.f32 %v159, %v181
    %v183 = vsub.f32 %v131, %v182
    %v185 = vperm.slane %v181, 0
    %v187 = vmul.f32 %v149, %v185
    %v189 = vperm.slane %v183, 0
    %v191 = vadd.f32 %v187, %v189
    %v193 = vperm.slane %v148, 0
    %195 = vmatpush.msra.mxu0 %v147
    %196 = vmatpush.msra.mxu0 %v146
    %197 = vmatpush.msra.mxu0 %v145
    %198 = vmatpush.msra.mxu0 %v144
    %199 = vmatpush.msra.mxu0 %v143
    %200 = vmatpush.msra.mxu0 %v142
    %201 = vmatpush.msra.mxu0 %v141
    %202 = vmatpush.msra.mxu0 %v140
    %203 = vmatpush.msra.mxu0 %v139
    %204 = vmatpush.msra.mxu0 %v138
    %205 = vmatpush.msra.mxu0 %v137
    %206 = vmatpush.msra.mxu0 %v136
    %207 = vmatpush.msra.mxu0 %v135
    %208 = vmatpush.msra.mxu0 %v134
    %209 = vmatpush.msra.mxu0 %v133
    %210 = vmatpush.msra.mxu0 %v132
    %211 = vmatmul.f32.gmra.mxu0 %v191
    %v212 = vpop.f32.mrf.mxu0
    %v213 = vadd.f32 %v193, %v212
    %214 = vdwg.mxu0
    %v215 = vld [vmem:[%s7] sm:$0x1]
    %v216 = vld [vmem:[%s8] sm:$0x1]
    %v217 = vld [vmem:[#allocation7] sm:$0xff]
    %v218 = vld [vmem:[#allocation7 + $0x8] sm:$0xff]
    %v219 = vld [vmem:[#allocation7 + $0x10] sm:$0xff]
    %v220 = vld [vmem:[#allocation7 + $0x18] sm:$0xff]
    %v221 = vld [vmem:[#allocation7 + $0x20] sm:$0xff]
    %v222 = vld [vmem:[#allocation7 + $0x28] sm:$0xff]
    %v223 = vld [vmem:[#allocation7 + $0x30] sm:$0xff]
    %v224 = vld [vmem:[#allocation7 + $0x38] sm:$0xff]
    %v225 = vld [vmem:[#allocation7 + $0x40] sm:$0xff]
    %v226 = vld [vmem:[#allocation7 + $0x48] sm:$0xff]
    %v227 = vld [vmem:[#allocation7 + $0x50] sm:$0xff]
    %v228 = vld [vmem:[#allocation7 + $0x58] sm:$0xff]
    %v229 = vld [vmem:[#allocation7 + $0x60] sm:$0xff]
    %v230 = vld [vmem:[#allocation7 + $0x68] sm:$0xff]
    %v231 = vld [vmem:[#allocation7 + $0x70] sm:$0xff]
    %v232 = vld [vmem:[#allocation7 + $0x78] sm:$0xff]
    %v233 = vld [vmem:[%s10] sm:$0x1]
    %v234 = vmax.f32 %v213, 0.0
    %v235 = vsel %vm151, %v234, 0.0
    %v236 = vrot.slane %v235, 4
    %v237 = vadd.f32 %v235, %v236
    %v238 = vrot.slane %v237, 2
    %v239 = vadd.f32 %v237, %v238
    %v240 = vrot.slane %v239, 1
    %v241 = vadd.f32 %v239, %v240
    %v242 = vmul.f32 %v241, 0.16666667
    %v243 = vsub.f32 %v234, %v242
    %v244 = vsel %vm151, %v243, 0.0
    %v245 = vmul.f32 %v244, %v244
    %v246 = vrot.slane %v245, 4
    %v247 = vadd.f32 %v245, %v246
    %v248 = vrot.slane %v247, 2
    %v249 = vadd.f32 %v247, %v248
    %v250 = vrot.slane %v249, 1
    %v251 = vadd.f32 %v249, %v250
    %v252 = vmul.f32 %v251, 0.16666667
    %v253 = vadd.f32 %v252, 1e-05
    %v254 = vrsqrt.pop %v253
    %v255 = vmul.f32 %v254, %v253
    %v256 = vmul.f32 %v255, %v254
    %v257 = vmul.f32 0.5, %v256
    %v258 = vsub.f32 1.5, %v257
    %v259 = vmul.f32 %v254, %v258
    %vm260 = vweird.f32 %v253
    %vm261 = vweird.f32 %v254
    %vm262 = vmor %vm260, %vm261
    %v263 = vsel %vm262, %v254, %v259
    %v264 = vmul.f32 %v215, %v263
    %v265 = vmul.f32 %v242, %v264
    %v266 = vsub.f32 %v216, %v265
    %v268 = vperm.slane %v264, 0
    %v270 = vmul.f32 %v234, %v268
    %v272 = vperm.slane %v266, 0
    %v274 = vadd.f32 %v270, %v272
    %v276 = vperm.slane %v233, 0
    %278 = vmatpush.msra.mxu0 %v232
    %279 = vmatpush.msra.mxu0 %v231
    %280 = vmatpush.msra.mxu0 %v230
    %281 = vmatpush.msra.mxu0 %v229
    %282 = vmatpush.msra.mxu0 %v228
    %283 = vmatpush.msra.mxu0 %v227
    %284 = vmatpush.msra.mxu0 %v226
    %285 = vmatpush.msra.mxu0 %v225
    %286 = vmatpush.msra.mxu0 %v224
    %287 = vmatpush.msra.mxu0 %v223
    %288 = vmatpush.msra.mxu0 %v222
    %289 = vmatpush.msra.mxu0 %v221
    %290 = vmatpush.msra.mxu0 %v220
    %291 = vmatpush.msra.mxu0 %v219
    %292 = vmatpush.msra.mxu0 %v218
    %293 = vmatpush.msra.mxu0 %v217
    %294 = vmatmul.f32.gmra.mxu0 %v274
    %v295 = vpop.f32.mrf.mxu0
    %v296 = vadd.f32 %v276, %v295
    %297 = vdwg.mxu0
    %298 = vst [vmem:[#allocation8] sm:$0xff] %v296
    // Predicated region
    $region58: #{_fwd.1} parent=1 // pred_check
      _
    $region59: #{_fwd.1} parent=1 // pred_check_branch
      %300 = sbr.rel (0) target = $region61
    $region60: #{_fwd.1} parent=1 // pred_region
      %302 = vsyncadd [#allocation4], 0
      %s304 = sshll.u32 [#allocation8], 4
      %s305 = int_to_ptr.vmem [resolvable:$true] %s304
      %s306 = sshll.u32 %s11, 4
      %s307 = int_to_ptr.hbm [resolvable:$true] %s306
      %309 = dma.vmem_to_hbm [thread:$0]  %s305, 128, %s307, [#allocation4]
    $region61: #{_fwd.1} parent=1 // pred_fallthru
      _
    // Predicated region
    $region62: #{_fwd.1} parent=1 // pred_check
      _
    $region63: #{_fwd.1} parent=1 // pred_check_branch
      %311 = sbr.rel (0) target = $region65
    $region64: #{_fwd.1} parent=1 // pred_region
      %313 = dma.done [#allocation4], 128
    $region65: #{_fwd.1} parent=1 // pred_fallthru
      _
    %314 = vsyncpa [#allocation3], 1
    %315 = vsyncpa [#allocation6], 1
    %316 = vsyncpa [#allocation4], 1

</llo_original>
